<compile_context>
chip_gen: v7x
topology: tpu7x:2x2x1
jax: 0.10.0
libtpu: 0.0.40
codegen_flags: <defaults>
</compile_context>

<pallas_src>
import functools

import jax
import jax.numpy as jnp
from jax.experimental import pallas as pl
from jax.experimental.pallas import tpu as pltpu

LANE = 128  # lane width; padded compute width of the final layer


def mlp_kernel(x_ref, w1_ref, b1_ref, w2_ref, b2_ref, w3_ref, b3_ref,
               w4_ref, b4_ref, o_ref):
    mm_dtype = w1_ref.dtype  # bf16 (or f32) matmul inputs; accumulate in f32
    # Layer 1: Linear(input_size, 128) + ReLU
    h = jnp.dot(x_ref[...], w1_ref[...], preferred_element_type=jnp.float32)
    h = jnp.maximum(h + b1_ref[...], 0.0)
    # Layer 2: Linear(128, 64) + ReLU
    h = jnp.dot(h.astype(mm_dtype), w2_ref[...],
                preferred_element_type=jnp.float32)
    h = jnp.maximum(h + b2_ref[...], 0.0)
    # Layer 3: Linear(64, 32) + ReLU
    h = jnp.dot(h.astype(mm_dtype), w3_ref[...],
                preferred_element_type=jnp.float32)
    h = jnp.maximum(h + b3_ref[...], 0.0)
    # Layer 4: Linear(32, 1), computed zero-padded to 128 MXU columns; only the real
    # column (col 0) is written back, so HBM output traffic stays B*4 bytes.
    y = jnp.dot(h.astype(mm_dtype), w4_ref[...],
                preferred_element_type=jnp.float32) + b4_ref[...]
    o_ref[...] = y[:, :1]


@functools.partial(jax.jit, static_argnames=("block_b", "matmul_dtype"))
def pong_forward(x, params, block_b=2048, matmul_dtype=jnp.bfloat16):
    """Pallas implementation of PongModel.forward.

    x: [B, D_in] float32
    params: dict with w1..w4 ([in, out]) and b1..b4 ([1, out]), float32.
    returns: [B, 1] float32
    """
    B, d_in = x.shape

    # Batch tile: big (MXU sublane fill, fewer grid steps), clamped to B for tiny
    # batches, multiple of 8 sublanes.
    bb = max(8, min(block_b, B))
    bb = ((bb + 7) // 8) * 8
    pad = (-B) % bb
    x_p = jnp.pad(x, ((0, pad), (0, 0))) if pad else x
    b_padded = B + pad
    grid = (b_padded // bb,)

    # Stream activations/weights in low precision for the MXU; biases stay f32 so the
    # bias-add/ReLU run on the f32 VPU path on all generations.
    x_p = x_p.astype(matmul_dtype)
    w1 = params["w1"].astype(matmul_dtype)
    w2 = params["w2"].astype(matmul_dtype)
    w3 = params["w3"].astype(matmul_dtype)
    w4 = params["w4"].astype(matmul_dtype)
    b1 = params["b1"].astype(jnp.float32)
    b2 = params["b2"].astype(jnp.float32)
    b3 = params["b3"].astype(jnp.float32)
    b4 = params["b4"].astype(jnp.float32)

    # Pad layer-4 to 128 columns for a well-formed MXU matmul; the kernel slices the
    # single real column back out before storing (output array itself is [B, 1]).
    w4 = jnp.pad(w4, ((0, 0), (0, LANE - w4.shape[1])))
    b4 = jnp.pad(b4, ((0, 0), (0, LANE - b4.shape[1])))

    def whole(arr):
        # Small operand, resident as one block; constant index_map -> not re-DMA'd
        # across grid steps (double-buffer overhead < 0.1 MiB total, negligible).
        return pl.BlockSpec(arr.shape, lambda i: (0, 0))

    out = pl.pallas_call(
        mlp_kernel,
        out_shape=jax.ShapeDtypeStruct((b_padded, 1), jnp.float32),
        grid_spec=pltpu.PrefetchScalarGridSpec(
            num_scalar_prefetch=0,
            grid=grid,
            in_specs=[
                pl.BlockSpec((bb, d_in), lambda i: (i, 0)),
                whole(w1), whole(b1),
                whole(w2), whole(b2),
                whole(w3), whole(b3),
                whole(w4), whole(b4),
            ],
            # Block last dim (1) equals the full array dim, so the (8,128) rule is
            # satisfied; writeback per tile is a single tiny contiguous DMA.
            out_specs=pl.BlockSpec((bb, 1), lambda i: (i, 0)),
        ),
        # Batch axis is embarrassingly parallel -> shards across the 2 TCs on v7x.
        compiler_params=pltpu.CompilerParams(
            dimension_semantics=("parallel",)),
    )(x_p, w1, b1, w2, b2, w3, b3, w4, b4)

    return out[:B, :]


def init_params(key, input_size):
    """Deterministic synthetic init matching nn.Linear shapes (stored transposed)."""
    sizes = [(input_size, 128), (128, 64), (64, 32), (32, 1)]
    params = {}
    for idx, (fan_in, fan_out) in enumerate(sizes, start=1):
        key, kw, kb = jax.random.split(key, 3)
        bound = 1.0 / float(fan_in) ** 0.5
        params[f"w{idx}"] = jax.random.uniform(
            kw, (fan_in, fan_out), jnp.float32, -bound, bound)
        params[f"b{idx}"] = jax.random.uniform(
            kb, (1, fan_out), jnp.float32, -bound, bound)
    return params


def reference_forward(x, params, matmul_dtype=jnp.float32):
    """Plain-JAX reference.  With matmul_dtype=bf16 it mirrors the kernel's numerics
    (bf16 matmul inputs, f32 accumulation, f32 bias/ReLU)."""
    h = x.astype(jnp.float32)
    for idx in range(1, 5):
        w = params[f"w{idx}"].astype(matmul_dtype)
        h = jnp.dot(h.astype(matmul_dtype), w,
                    preferred_element_type=jnp.float32)
        h = h + params[f"b{idx}"]
        if idx < 4:
            h = jnp.maximum(h, 0.0)
    return h


if __name__ == "__main__":
    key = jax.random.PRNGKey(0)
    input_size = 32
    batch = 64

    key, kx = jax.random.split(key)
    x = jax.random.normal(kx, (batch, input_size), jnp.float32)
    params = init_params(key, input_size)

    out = pong_forward(x, params)
    out = jax.block_until_ready(out)
    assert out.shape == (batch, 1)

    # Tight check against a reference using the kernel's exact mixed-precision math.
    ref_mixed = reference_forward(x, params, matmul_dtype=jnp.bfloat16)
    assert jnp.allclose(out, ref_mixed, atol=5e-3, rtol=5e-3)

    # Loose check against the original full-f32 module semantics.
    ref_f32 = reference_forward(x, params, matmul_dtype=jnp.float32)
    assert jnp.allclose(out, ref_f32, atol=5e-2, rtol=5e-2)

    print("KERNEL_OK")
</pallas_src>

<mosaic_0001>
module attributes {stable_mosaic.version = 11 : i64} {
  func.func @mlp_kernel(%arg0: i32, %arg1: memref<64x32xbf16, #tpu.memory_space<vmem>>, %arg2: memref<32x128xbf16, #tpu.memory_space<vmem>>, %arg3: memref<1x128xf32, #tpu.memory_space<vmem>>, %arg4: memref<128x64xbf16, #tpu.memory_space<vmem>>, %arg5: memref<1x64xf32, #tpu.memory_space<vmem>>, %arg6: memref<64x32xbf16, #tpu.memory_space<vmem>>, %arg7: memref<1x32xf32, #tpu.memory_space<vmem>>, %arg8: memref<32x128xbf16, #tpu.memory_space<vmem>>, %arg9: memref<1x128xf32, #tpu.memory_space<vmem>>, %arg10: memref<64x1xf32, #tpu.memory_space<vmem>>) attributes {dimension_semantics = [#tpu.dimension_semantics<parallel>], iteration_bounds = array<i64: 1>, scalar_prefetch = 0 : i64, scratch_operands = 0 : i64, tpu.core_type = #tpu.core_type<tc>, window_params = [{transform_indices = @transform_0, window_bounds = array<i64: 64, 32>}, {pipeline_mode = #tpu.pipeline_mode<synchronous>, transform_indices = @transform_1, window_bounds = array<i64: 32, 128>}, {pipeline_mode = #tpu.pipeline_mode<synchronous>, transform_indices = @transform_2, window_bounds = array<i64: 1, 128>}, {pipeline_mode = #tpu.pipeline_mode<synchronous>, transform_indices = @transform_3, window_bounds = array<i64: 128, 64>}, {pipeline_mode = #tpu.pipeline_mode<synchronous>, transform_indices = @transform_4, window_bounds = array<i64: 1, 64>}, {pipeline_mode = #tpu.pipeline_mode<synchronous>, transform_indices = @transform_5, window_bounds = array<i64: 64, 32>}, {pipeline_mode = #tpu.pipeline_mode<synchronous>, transform_indices = @transform_6, window_bounds = array<i64: 1, 32>}, {pipeline_mode = #tpu.pipeline_mode<synchronous>, transform_indices = @transform_7, window_bounds = array<i64: 32, 128>}, {pipeline_mode = #tpu.pipeline_mode<synchronous>, transform_indices = @transform_8, window_bounds = array<i64: 1, 128>}, {transform_indices = @transform_9, window_bounds = array<i64: 64, 1>}]} {
    %c0 = arith.constant 0 : index
    %c0_0 = arith.constant 0 : index
    %0 = vector.load %arg1[%c0, %c0_0] : memref<64x32xbf16, #tpu.memory_space<vmem>>, vector<64x32xbf16>
    %c0_1 = arith.constant 0 : index
    %c0_2 = arith.constant 0 : index
    %1 = vector.load %arg2[%c0_1, %c0_2] : memref<32x128xbf16, #tpu.memory_space<vmem>>, vector<32x128xbf16>
    %cst = arith.constant dense<0.000000e+00> : vector<64x128xf32>
    %2 = tpu.matmul %0, %1, %cst {dimension_numbers = #tpu.dot_dimension_numbers<[1], [0], [0], [1], [0, 0, 1, 1], [], []>} : vector<64x32xbf16>, vector<32x128xbf16>, vector<64x128xf32> -> vector<64x128xf32>
    %c0_3 = arith.constant 0 : index
    %c0_4 = arith.constant 0 : index
    %3 = vector.load %arg3[%c0_3, %c0_4] : memref<1x128xf32, #tpu.memory_space<vmem>>, vector<1x128xf32>
    %4 = vector.broadcast %3 : vector<1x128xf32> to vector<64x128xf32>
    %5 = arith.addf %2, %4 : vector<64x128xf32>
    %cst_5 = arith.constant 0.000000e+00 : f32
    %6 = vector.broadcast %cst_5 : f32 to vector<64x128xf32>
    %7 = arith.maximumf %5, %6 : vector<64x128xf32>
    %8 = arith.truncf %7 : vector<64x128xf32> to vector<64x128xbf16>
    %c0_6 = arith.constant 0 : index
    %c0_7 = arith.constant 0 : index
    %9 = vector.load %arg4[%c0_6, %c0_7] : memref<128x64xbf16, #tpu.memory_space<vmem>>, vector<128x64xbf16>
    %cst_8 = arith.constant dense<0.000000e+00> : vector<64x64xf32>
    %10 = tpu.matmul %8, %9, %cst_8 {dimension_numbers = #tpu.dot_dimension_numbers<[1], [0], [0], [1], [0, 0, 1, 1], [], []>} : vector<64x128xbf16>, vector<128x64xbf16>, vector<64x64xf32> -> vector<64x64xf32>
    %c0_9 = arith.constant 0 : index
    %c0_10 = arith.constant 0 : index
    %11 = vector.load %arg5[%c0_9, %c0_10] : memref<1x64xf32, #tpu.memory_space<vmem>>, vector<1x64xf32>
    %12 = vector.broadcast %11 : vector<1x64xf32> to vector<64x64xf32>
    %13 = arith.addf %10, %12 : vector<64x64xf32>
    %cst_11 = arith.constant 0.000000e+00 : f32
    %14 = vector.broadcast %cst_11 : f32 to vector<64x64xf32>
    %15 = arith.maximumf %13, %14 : vector<64x64xf32>
    %16 = arith.truncf %15 : vector<64x64xf32> to vector<64x64xbf16>
    %c0_12 = arith.constant 0 : index
    %c0_13 = arith.constant 0 : index
    %17 = vector.load %arg6[%c0_12, %c0_13] : memref<64x32xbf16, #tpu.memory_space<vmem>>, vector<64x32xbf16>
    %cst_14 = arith.constant dense<0.000000e+00> : vector<64x32xf32>
    %18 = tpu.matmul %16, %17, %cst_14 {dimension_numbers = #tpu.dot_dimension_numbers<[1], [0], [0], [1], [0, 0, 1, 1], [], []>} : vector<64x64xbf16>, vector<64x32xbf16>, vector<64x32xf32> -> vector<64x32xf32>
    %c0_15 = arith.constant 0 : index
    %c0_16 = arith.constant 0 : index
    %19 = vector.load %arg7[%c0_15, %c0_16] : memref<1x32xf32, #tpu.memory_space<vmem>>, vector<1x32xf32>
    %20 = vector.broadcast %19 : vector<1x32xf32> to vector<64x32xf32>
    %21 = arith.addf %18, %20 : vector<64x32xf32>
    %cst_17 = arith.constant 0.000000e+00 : f32
    %22 = vector.broadcast %cst_17 : f32 to vector<64x32xf32>
    %23 = arith.maximumf %21, %22 : vector<64x32xf32>
    %24 = arith.truncf %23 : vector<64x32xf32> to vector<64x32xbf16>
    %c0_18 = arith.constant 0 : index
    %c0_19 = arith.constant 0 : index
    %25 = vector.load %arg8[%c0_18, %c0_19] : memref<32x128xbf16, #tpu.memory_space<vmem>>, vector<32x128xbf16>
    %cst_20 = arith.constant dense<0.000000e+00> : vector<64x128xf32>
    %26 = tpu.matmul %24, %25, %cst_20 {dimension_numbers = #tpu.dot_dimension_numbers<[1], [0], [0], [1], [0, 0, 1, 1], [], []>} : vector<64x32xbf16>, vector<32x128xbf16>, vector<64x128xf32> -> vector<64x128xf32>
    %c0_21 = arith.constant 0 : index
    %c0_22 = arith.constant 0 : index
    %27 = vector.load %arg9[%c0_21, %c0_22] : memref<1x128xf32, #tpu.memory_space<vmem>>, vector<1x128xf32>
    %28 = vector.broadcast %27 : vector<1x128xf32> to vector<64x128xf32>
    %29 = arith.addf %26, %28 : vector<64x128xf32>
    %30 = vector.extract_strided_slice %29 {offsets = [0, 0], sizes = [64, 1], strides = [1, 1]} : vector<64x128xf32> to vector<64x1xf32>
    %c0_23 = arith.constant 0 : index
    %c0_24 = arith.constant 0 : index
    %31 = vector.load %arg10[%c0_23, %c0_24] : memref<64x1xf32, #tpu.memory_space<vmem>>, vector<64x1xf32>
    tpu.vector_store %arg10[%c0_23, %c0_24], %30 {strides = array<i32>} : memref<64x1xf32, #tpu.memory_space<vmem>>, vector<64x1xf32>,
    return
  }
  func.func @transform_0(%arg0: i32) -> (i32, i32) {
    %c0_i32 = arith.constant 0 : i32
    %c0_i32_0 = arith.constant 0 : i32
    return %arg0, %c0_i32 : i32, i32
  }
  func.func @transform_1(%arg0: i32) -> (i32, i32) {
    %c0_i32 = arith.constant 0 : i32
    %c0_i32_0 = arith.constant 0 : i32
    %c0_i32_1 = arith.constant 0 : i32
    return %c0_i32, %c0_i32_0 : i32, i32
  }
  func.func @transform_2(%arg0: i32) -> (i32, i32) {
    %c0_i32 = arith.constant 0 : i32
    %c0_i32_0 = arith.constant 0 : i32
    %c0_i32_1 = arith.constant 0 : i32
    return %c0_i32, %c0_i32_0 : i32, i32
  }
  func.func @transform_3(%arg0: i32) -> (i32, i32) {
    %c0_i32 = arith.constant 0 : i32
    %c0_i32_0 = arith.constant 0 : i32
    %c0_i32_1 = arith.constant 0 : i32
    return %c0_i32, %c0_i32_0 : i32, i32
  }
  func.func @transform_4(%arg0: i32) -> (i32, i32) {
    %c0_i32 = arith.constant 0 : i32
    %c0_i32_0 = arith.constant 0 : i32
    %c0_i32_1 = arith.constant 0 : i32
    return %c0_i32, %c0_i32_0 : i32, i32
  }
  func.func @transform_5(%arg0: i32) -> (i32, i32) {
    %c0_i32 = arith.constant 0 : i32
    %c0_i32_0 = arith.constant 0 : i32
    %c0_i32_1 = arith.constant 0 : i32
    return %c0_i32, %c0_i32_0 : i32, i32
  }
  func.func @transform_6(%arg0: i32) -> (i32, i32) {
    %c0_i32 = arith.constant 0 : i32
    %c0_i32_0 = arith.constant 0 : i32
    %c0_i32_1 = arith.constant 0 : i32
    return %c0_i32, %c0_i32_0 : i32, i32
  }
  func.func @transform_7(%arg0: i32) -> (i32, i32) {
    %c0_i32 = arith.constant 0 : i32
    %c0_i32_0 = arith.constant 0 : i32
    %c0_i32_1 = arith.constant 0 : i32
    return %c0_i32, %c0_i32_0 : i32, i32
  }
  func.func @transform_8(%arg0: i32) -> (i32, i32) {
    %c0_i32 = arith.constant 0 : i32
    %c0_i32_0 = arith.constant 0 : i32
    %c0_i32_1 = arith.constant 0 : i32
    return %c0_i32, %c0_i32_0 : i32, i32
  }
  func.func @transform_9(%arg0: i32) -> (i32, i32) {
    %c0_i32 = arith.constant 0 : i32
    %c0_i32_0 = arith.constant 0 : i32
    return %arg0, %c0_i32 : i32, i32
  }
}

</mosaic_0001>

<llo_original>
// kernel: pong_forward.1
$region0: #{pong_forward.1}
  #allocation0 [shape = 'u32[]', space=smem, size = 0x4, offset = 0x4, fixed_abs, tag = 'smem constant byte address 0x4 - core index']
  #allocation1 [shape = 'u32[144,128]{1,0:T(1,128)}', space=vmem, size = 0x12000, scoped, tag = 'internal scratch']
  %s0 = inlined_call_operand.vmem [shape: bf16[64,32], index: 0, kind: input, shape index: {}]
  %s1 = inlined_call_operand.vmem [shape: bf16[32,128], index: 1, kind: input, shape index: {}]
  %s2 = inlined_call_operand.vmem [shape: f32[1,128], index: 2, kind: input, shape index: {}]
  %s3 = inlined_call_operand.vmem [shape: bf16[128,64], index: 3, kind: input, shape index: {}]
  %s4 = inlined_call_operand.vmem [shape: f32[1,64], index: 4, kind: input, shape index: {}]
  %s5 = inlined_call_operand.vmem [shape: bf16[64,32], index: 5, kind: input, shape index: {}]
  %s6 = inlined_call_operand.vmem [shape: f32[1,32], index: 6, kind: input, shape index: {}]
  %s7 = inlined_call_operand.vmem [shape: bf16[32,128], index: 7, kind: input, shape index: {}]
  %s8 = inlined_call_operand.vmem [shape: f32[1,128], index: 8, kind: input, shape index: {}]
  %s9 = inlined_call_operand.vmem [shape: f32[64,1], index: 9, kind: output, shape index: {}]
  %s10 = sld [smem:[#allocation0]]
  $region46: #{pong_forward.1} parent=0
    _
  %s12 = ssub.s32 1, %s10
  %s13 = scalar_select 0, %s12, %s10
  // Predicated region
  $region2: #{pong_forward.1} parent=0 // pred_check
    _
  $region3: #{pong_forward.1} parent=0 // pred_check_branch
    %15 = sbr.rel (0) target = $region5
  $region4: #{pong_forward.1} parent=0 // pred_region
    _
  $region5: #{pong_forward.1} parent=0 // pred_fallthru
    _
  // Predicated region
  $region6: #{pong_forward.1} parent=0 // pred_check
    _
  $region7: #{pong_forward.1} parent=0 // pred_check_branch
    %17 = sbr.rel (0) target = $region9
  $region8: #{pong_forward.1} parent=0 // pred_region
    _
  $region9: #{pong_forward.1} parent=0 // pred_fallthru
    _
  // Predicated region
  $region10: #{pong_forward.1} parent=0 // pred_check
    _
  $region11: #{pong_forward.1} parent=0 // pred_check_branch
    %19 = sbr.rel (0) target = $region13
  $region12: #{pong_forward.1} parent=0 // pred_region
    _
  $region13: #{pong_forward.1} parent=0 // pred_fallthru
    _
  // Predicated region
  $region14: #{pong_forward.1} parent=0 // pred_check
    _
  $region15: #{pong_forward.1} parent=0 // pred_check_branch
    %21 = sbr.rel (0) target = $region17
  $region16: #{pong_forward.1} parent=0 // pred_region
    _
  $region17: #{pong_forward.1} parent=0 // pred_fallthru
    _
  // Predicated region
  $region18: #{pong_forward.1} parent=0 // pred_check
    _
  $region19: #{pong_forward.1} parent=0 // pred_check_branch
    %23 = sbr.rel (0) target = $region21
  $region20: #{pong_forward.1} parent=0 // pred_region
    _
  $region21: #{pong_forward.1} parent=0 // pred_fallthru
    _
  // Predicated region
  $region22: #{pong_forward.1} parent=0 // pred_check
    _
  $region23: #{pong_forward.1} parent=0 // pred_check_branch
    %25 = sbr.rel (0) target = $region25
  $region24: #{pong_forward.1} parent=0 // pred_region
    _
  $region25: #{pong_forward.1} parent=0 // pred_fallthru
    _
  // Predicated region
  $region26: #{pong_forward.1} parent=0 // pred_check
    _
  $region27: #{pong_forward.1} parent=0 // pred_check_branch
    %27 = sbr.rel (0) target = $region29
  $region28: #{pong_forward.1} parent=0 // pred_region
    _
  $region29: #{pong_forward.1} parent=0 // pred_fallthru
    _
  // Predicated region
  $region30: #{pong_forward.1} parent=0 // pred_check
    _
  $region31: #{pong_forward.1} parent=0 // pred_check_branch
    %29 = sbr.rel (0) target = $region33
  $region32: #{pong_forward.1} parent=0 // pred_region
    _
  $region33: #{pong_forward.1} parent=0 // pred_fallthru
    _
  // Predicated region
  $region34: #{pong_forward.1} parent=0 // pred_check
    _
  $region35: #{pong_forward.1} parent=0 // pred_check_branch
    %31 = sbr.rel (0) target = $region37
  $region36: #{pong_forward.1} parent=0 // pred_region
    _
  $region37: #{pong_forward.1} parent=0 // pred_fallthru
    _
  %v33 = vld [vmem:[%s0] sm:$0xf]
  %v34 = vld [vmem:[%s0 + $0x4] sm:$0xf]
  %v35 = vld [vmem:[%s0 + $0x8] sm:$0xf]
  %v36 = vld [vmem:[%s0 + $0xc] sm:$0xf]
  %v37 = vld [vmem:[%s0 + $0x10] sm:$0xf]
  %v38 = vld [vmem:[%s0 + $0x14] sm:$0xf]
  %v39 = vld [vmem:[%s0 + $0x18] sm:$0xf]
  %v40 = vld [vmem:[%s0 + $0x1c] sm:$0xf]
  %v41 = vld [vmem:[%s1] sm:$0xf]
  %v42 = vld [vmem:[%s1 + $0x4] sm:$0xf]
  %v43 = vld [vmem:[%s1 + $0x8] sm:$0xf]
  %v44 = vld [vmem:[%s1 + $0xc] sm:$0xf]
  %v45 = vld [vmem:[%s2] sm:$0x1]
  %v47 = vlaneseq
  %v48 = vshrl.u32 %v47, 7
  %v49 = vsub.s32 0, %v48
  %v50 = vrot.slane %v45, %v49
  %v60 = vunpack.c.l.b16 %v33
  %v61 = vunpack.c.l.b16 %v34
  %v62 = vunpack.c.l.b16 %v35
  %v63 = vunpack.c.l.b16 %v36
  %v64 = vunpack.c.l.b16 %v37
  %v65 = vunpack.c.l.b16 %v38
  %v66 = vunpack.c.l.b16 %v39
  %v67 = vunpack.c.l.b16 %v40
  %v68 = vpack.c.b16 %v61, %v60
  %v69 = vpack.c.b16 %v63, %v62
  %v70 = vpack.c.b16 %v65, %v64
  %v71 = vpack.c.b16 %v67, %v66
  %v76 = vunpack.c.l.b16 %v41
  %v77 = vunpack.c.l.b16 %v42
  %v78 = vunpack.c.l.b16 %v43
  %v79 = vunpack.c.l.b16 %v44
  %v80 = vpack.c.b16 %v77, %v76
  %v81 = vpack.c.b16 %v79, %v78
  %vm84 = vcmask 261120
  %v86 = vsel %vm84, %v68, 0
  %v89 = vsel %vm84, %v69, 0
  %v92 = vsel %vm84, %v70, 0
  %v95 = vsel %vm84, %v71, 0
  %97 = vmatprep.subr.bf16.mxu0 0
  %98 = vmatpush1.bf16.msra.mxu0 %v80
  %99 = vmatprep.subr.bf16.mxu0 0
  %100 = vmatpush1.bf16.msra.mxu0 %v81
  %101 = vmatprep.subr.bf16.mxu0 0
  %102 = vmatpush1.bf16.msra.mxu0 0
  %103 = vmatprep.subr.bf16.mxu0 0
  %104 = vmatpush1.bf16.msra.mxu0 0
  %105 = vmatprep.subr.bf16.mxu0 0
  %106 = vmatpush1.bf16.msra.mxu0 0
  %107 = vmatprep.subr.bf16.mxu0 0
  %108 = vmatpush1.bf16.msra.mxu0 0
  %109 = vmatprep.subr.bf16.mxu0 0
  %110 = vmatpush1.bf16.msra.mxu0 0
  %111 = vmatprep.subr.bf16.mxu0 0
  %112 = vmatpush1.bf16.msra.mxu0 0
  %113 = vmatprep.subr.bf16.mxu0 0
  %114 = vmatpush1.bf16.msra.mxu0 0
  %115 = vmatprep.subr.bf16.mxu0 0
  %116 = vmatpush1.bf16.msra.mxu0 0
  %117 = vmatprep.subr.bf16.mxu0 0
  %118 = vmatpush1.bf16.msra.mxu0 0
  %119 = vmatprep.subr.bf16.mxu0 0
  %120 = vmatpush1.bf16.msra.mxu0 0
  %121 = vmatprep.subr.bf16.mxu0 0
  %122 = vmatpush1.bf16.msra.mxu0 0
  %123 = vmatprep.subr.bf16.mxu0 0
  %124 = vmatpush1.bf16.msra.mxu0 0
  %125 = vmatprep.subr.bf16.mxu0 0
  %126 = vmatpush1.bf16.msra.mxu0 0
  %127 = vmatprep.subr.bf16.mxu0 0
  %128 = vmatpush1.bf16.msra.mxu0 0
  %129 = vmatprep.mubr.bf16.mxu0 0
  %130 = vmatmul.mubr.bf16.gmra.mrb[0].mxu0 %v86
  %v131 = vpop.f32.mrb[0].mxu0
  %v132 = vadd.f32 %v50, %v131
  %v133 = vpop.f32.mrb[0].mxu0
  %v134 = vpop.f32.mrb[0].mxu0
  %v135 = vadd.f32 %v50, %v134
  %v136 = vpop.f32.mrb[0].mxu0
  %137 = vmatprep.mubr.bf16.mxu0 0
  %138 = vmatmul.mubr.bf16.gmra.mrb[0].mxu0 %v89
  %v139 = vpop.f32.mrb[0].mxu0
  %v140 = vadd.f32 %v50, %v139
  %v141 = vpop.f32.mrb[0].mxu0
  %v142 = vpop.f32.mrb[0].mxu0
  %v143 = vadd.f32 %v50, %v142
  %v144 = vpop.f32.mrb[0].mxu0
  %145 = vmatprep.mubr.bf16.mxu0 0
  %146 = vmatmul.mubr.bf16.gmra.mrb[0].mxu0 %v92
  %v147 = vpop.f32.mrb[0].mxu0
  %v148 = vadd.f32 %v50, %v147
  %v149 = vpop.f32.mrb[0].mxu0
  %v150 = vpop.f32.mrb[0].mxu0
  %v151 = vadd.f32 %v50, %v150
  %v152 = vpop.f32.mrb[0].mxu0
  %153 = vmatprep.mubr.bf16.mxu0 0
  %154 = vmatmul.mubr.bf16.gmra.mrb[0].mxu0 %v95
  %v155 = vpop.f32.mrb[0].mxu0
  %v156 = vadd.f32 %v50, %v155
  %v157 = vpop.f32.mrb[0].mxu0
  %v158 = vpop.f32.mrb[0].mxu0
  %v159 = vadd.f32 %v50, %v158
  %v160 = vpop.f32.mrb[0].mxu0
  %161 = vdwg.mxu0
  %v162 = vmax.f32 %v132, 0.0
  %v163 = vmax.f32 %v135, 0.0
  %v164 = vmax.f32 %v140, 0.0
  %v165 = vmax.f32 %v143, 0.0
  %v166 = vmax.f32 %v148, 0.0
  %v167 = vmax.f32 %v151, 0.0
  %v168 = vmax.f32 %v156, 0.0
  %v169 = vmax.f32 %v159, 0.0
  %v170 = vpack.c.bf16 %v163, %v162
  %v171 = vpack.c.bf16 %v165, %v164
  %v172 = vpack.c.bf16 %v167, %v166
  %v173 = vpack.c.bf16 %v169, %v168
  %v174 = vld [vmem:[%s3] sm:$0xf]
  %v175 = vld [vmem:[%s3 + $0x4] sm:$0xf]
  %v176 = vld [vmem:[%s3 + $0x8] sm:$0xf]
  %v177 = vld [vmem:[%s3 + $0xc] sm:$0xf]
  %v178 = vld [vmem:[%s3 + $0x10] sm:$0xf]
  %v179 = vld [vmem:[%s3 + $0x14] sm:$0xf]
  %v180 = vld [vmem:[%s3 + $0x18] sm:$0xf]
  %v181 = vld [vmem:[%s3 + $0x1c] sm:$0xf]
  %v182 = vld [vmem:[%s3 + $0x20] sm:$0xf]
  %v183 = vld [vmem:[%s3 + $0x24] sm:$0xf]
  %v184 = vld [vmem:[%s3 + $0x28] sm:$0xf]
  %v185 = vld [vmem:[%s3 + $0x2c] sm:$0xf]
  %v186 = vld [vmem:[%s3 + $0x30] sm:$0xf]
  %v187 = vld [vmem:[%s3 + $0x34] sm:$0xf]
  %v188 = vld [vmem:[%s3 + $0x38] sm:$0xf]
  %v189 = vld [vmem:[%s3 + $0x3c] sm:$0xf]
  %v190 = vld [vmem:[%s4] sm:$0x1]
  %v192 = vlaneseq
  %v193 = vshrl.u32 %v192, 7
  %v194 = vsub.s32 0, %v193
  %v195 = vrot.slane %v190, %v194
  %v213 = vunpack.c.l.b16 %v174
  %v214 = vunpack.c.l.b16 %v175
  %v215 = vunpack.c.l.b16 %v176
  %v216 = vunpack.c.l.b16 %v177
  %v217 = vunpack.c.l.b16 %v178
  %v218 = vunpack.c.l.b16 %v179
  %v219 = vunpack.c.l.b16 %v180
  %v220 = vunpack.c.l.b16 %v181
  %v221 = vunpack.c.l.b16 %v182
  %v222 = vunpack.c.l.b16 %v183
  %v223 = vunpack.c.l.b16 %v184
  %v224 = vunpack.c.l.b16 %v185
  %v225 = vunpack.c.l.b16 %v186
  %v226 = vunpack.c.l.b16 %v187
  %v227 = vunpack.c.l.b16 %v188
  %v228 = vunpack.c.l.b16 %v189
  %v229 = vpack.c.b16 %v214, %v213
  %v230 = vpack.c.b16 %v216, %v215
  %v231 = vpack.c.b16 %v218, %v217
  %v232 = vpack.c.b16 %v220, %v219
  %v233 = vpack.c.b16 %v222, %v221
  %v234 = vpack.c.b16 %v224, %v223
  %v235 = vpack.c.b16 %v226, %v225
  %v236 = vpack.c.b16 %v228, %v227
  %245 = vmatprep.subr.bf16.mxu0 0
  %246 = vmatpush1.bf16.msra.mxu0 %v229
  %247 = vmatprep.subr.bf16.mxu0 0
  %248 = vmatpush1.bf16.msra.mxu0 %v230
  %249 = vmatprep.subr.bf16.mxu0 0
  %250 = vmatpush1.bf16.msra.mxu0 %v231
  %251 = vmatprep.subr.bf16.mxu0 0
  %252 = vmatpush1.bf16.msra.mxu0 %v232
  %253 = vmatprep.subr.bf16.mxu0 0
  %254 = vmatpush1.bf16.msra.mxu0 %v233
  %255 = vmatprep.subr.bf16.mxu0 0
  %256 = vmatpush1.bf16.msra.mxu0 %v234
  %257 = vmatprep.subr.bf16.mxu0 0
  %258 = vmatpush1.bf16.msra.mxu0 %v235
  %259 = vmatprep.subr.bf16.mxu0 0
  %260 = vmatpush1.bf16.msra.mxu0 %v236
  %261 = vmatprep.subr.bf16.mxu0 0
  %262 = vmatpush1.bf16.msra.mxu0 0
  %263 = vmatprep.subr.bf16.mxu0 0
  %264 = vmatpush1.bf16.msra.mxu0 0
  %265 = vmatprep.subr.bf16.mxu0 0
  %266 = vmatpush1.bf16.msra.mxu0 0
  %267 = vmatprep.subr.bf16.mxu0 0
  %268 = vmatpush1.bf16.msra.mxu0 0
  %269 = vmatprep.subr.bf16.mxu0 0
  %270 = vmatpush1.bf16.msra.mxu0 0
  %271 = vmatprep.subr.bf16.mxu0 0
  %272 = vmatpush1.bf16.msra.mxu0 0
  %273 = vmatprep.subr.bf16.mxu0 0
  %274 = vmatpush1.bf16.msra.mxu0 0
  %275 = vmatprep.subr.bf16.mxu0 0
  %276 = vmatpush1.bf16.msra.mxu0 0
  %277 = vmatprep.mubr.bf16.mxu0 0
  %278 = vmatmul.mubr.bf16.gmra.mrb[0].mxu0 %v170
  %v279 = vpop.f32.mrb[0].mxu0
  %v280 = vadd.f32 %v195, %v279
  %v281 = vpop.f32.mrb[0].mxu0
  %v282 = vpop.f32.mrb[0].mxu0
  %v283 = vadd.f32 %v195, %v282
  %v284 = vpop.f32.mrb[0].mxu0
  %285 = vmatprep.mubr.bf16.mxu0 0
  %286 = vmatmul.mubr.bf16.gmra.mrb[0].mxu0 %v171
  %v287 = vpop.f32.mrb[0].mxu0
  %v288 = vadd.f32 %v195, %v287
  %v289 = vpop.f32.mrb[0].mxu0
  %v290 = vpop.f32.mrb[0].mxu0
  %v291 = vadd.f32 %v195, %v290
  %v292 = vpop.f32.mrb[0].mxu0
  %293 = vmatprep.mubr.bf16.mxu0 0
  %294 = vmatmul.mubr.bf16.gmra.mrb[0].mxu0 %v172
  %v295 = vpop.f32.mrb[0].mxu0
  %v296 = vadd.f32 %v195, %v295
  %v297 = vpop.f32.mrb[0].mxu0
  %v298 = vpop.f32.mrb[0].mxu0
  %v299 = vadd.f32 %v195, %v298
  %v300 = vpop.f32.mrb[0].mxu0
  %301 = vmatprep.mubr.bf16.mxu0 0
  %302 = vmatmul.mubr.bf16.gmra.mrb[0].mxu0 %v173
  %v303 = vpop.f32.mrb[0].mxu0
  %v304 = vadd.f32 %v195, %v303
  %v305 = vpop.f32.mrb[0].mxu0
  %v306 = vpop.f32.mrb[0].mxu0
  %v307 = vadd.f32 %v195, %v306
  %v308 = vpop.f32.mrb[0].mxu0
  %309 = vdwg.mxu0
  %v310 = vmax.f32 %v280, 0.0
  %v311 = vmax.f32 %v283, 0.0
  %v312 = vmax.f32 %v288, 0.0
  %v313 = vmax.f32 %v291, 0.0
  %v314 = vmax.f32 %v296, 0.0
  %v315 = vmax.f32 %v299, 0.0
  %v316 = vmax.f32 %v304, 0.0
  %v317 = vmax.f32 %v307, 0.0
  %v318 = vpack.c.bf16 %v311, %v310
  %v319 = vpack.c.bf16 %v313, %v312
  %v320 = vpack.c.bf16 %v315, %v314
  %v321 = vpack.c.bf16 %v317, %v316
  %v322 = vld [vmem:[%s5] sm:$0xf]
  %v323 = vld [vmem:[%s5 + $0x4] sm:$0xf]
  %v324 = vld [vmem:[%s5 + $0x8] sm:$0xf]
  %v325 = vld [vmem:[%s5 + $0xc] sm:$0xf]
  %v326 = vld [vmem:[%s5 + $0x10] sm:$0xf]
  %v327 = vld [vmem:[%s5 + $0x14] sm:$0xf]
  %v328 = vld [vmem:[%s5 + $0x18] sm:$0xf]
  %v329 = vld [vmem:[%s5 + $0x1c] sm:$0xf]
  %v330 = vld [vmem:[%s6] sm:$0x1]
  %v332 = vlaneseq
  %v333 = vshrl.u32 %v332, 7
  %v334 = vsub.s32 0, %v333
  %v335 = vrot.slane %v330, %v334
  %v345 = vunpack.c.l.b16 %v322
  %v346 = vunpack.c.l.b16 %v323
  %v347 = vunpack.c.l.b16 %v324
  %v348 = vunpack.c.l.b16 %v325
  %v349 = vunpack.c.l.b16 %v326
  %v350 = vunpack.c.l.b16 %v327
  %v351 = vunpack.c.l.b16 %v328
  %v352 = vunpack.c.l.b16 %v329
  %v353 = vpack.c.b16 %v346, %v345
  %v354 = vpack.c.b16 %v348, %v347
  %v355 = vpack.c.b16 %v350, %v349
  %v356 = vpack.c.b16 %v352, %v351
  %vm361 = vcmask 523264
  %v363 = vsel %vm361, %v318, 0
  %v366 = vsel %vm361, %v319, 0
  %v369 = vsel %vm361, %v320, 0
  %v372 = vsel %vm361, %v321, 0
  %374 = vmatprep.subr.bf16.mxu0 0
  %375 = vmatpush1.bf16.msra.mxu0 %v353
  %376 = vmatprep.subr.bf16.mxu0 0
  %377 = vmatpush1.bf16.msra.mxu0 %v354
  %378 = vmatprep.subr.bf16.mxu0 0
  %379 = vmatpush1.bf16.msra.mxu0 %v355
  %380 = vmatprep.subr.bf16.mxu0 0
  %381 = vmatpush1.bf16.msra.mxu0 %v356
  %382 = vmatprep.subr.bf16.mxu0 0
  %383 = vmatpush1.bf16.msra.mxu0 0
  %384 = vmatprep.subr.bf16.mxu0 0
  %385 = vmatpush1.bf16.msra.mxu0 0
  %386 = vmatprep.subr.bf16.mxu0 0
  %387 = vmatpush1.bf16.msra.mxu0 0
  %388 = vmatprep.subr.bf16.mxu0 0
  %389 = vmatpush1.bf16.msra.mxu0 0
  %390 = vmatprep.subr.bf16.mxu0 0
  %391 = vmatpush1.bf16.msra.mxu0 0
  %392 = vmatprep.subr.bf16.mxu0 0
  %393 = vmatpush1.bf16.msra.mxu0 0
  %394 = vmatprep.subr.bf16.mxu0 0
  %395 = vmatpush1.bf16.msra.mxu0 0
  %396 = vmatprep.subr.bf16.mxu0 0
  %397 = vmatpush1.bf16.msra.mxu0 0
  %398 = vmatprep.subr.bf16.mxu0 0
  %399 = vmatpush1.bf16.msra.mxu0 0
  %400 = vmatprep.subr.bf16.mxu0 0
  %401 = vmatpush1.bf16.msra.mxu0 0
  %402 = vmatprep.subr.bf16.mxu0 0
  %403 = vmatpush1.bf16.msra.mxu0 0
  %404 = vmatprep.subr.bf16.mxu0 0
  %405 = vmatpush1.bf16.msra.mxu0 0
  %406 = vmatprep.mubr.bf16.mxu0 0
  %407 = vmatmul.mubr.bf16.gmra.mrb[0].mxu0 %v363
  %v408 = vpop.f32.mrb[0].mxu0
  %v409 = vadd.f32 %v335, %v408
  %v410 = vpop.f32.mrb[0].mxu0
  %v411 = vpop.f32.mrb[0].mxu0
  %v412 = vadd.f32 %v335, %v411
  %v413 = vpop.f32.mrb[0].mxu0
  %414 = vmatprep.mubr.bf16.mxu0 0
  %415 = vmatmul.mubr.bf16.gmra.mrb[0].mxu0 %v366
  %v416 = vpop.f32.mrb[0].mxu0
  %v417 = vadd.f32 %v335, %v416
  %v418 = vpop.f32.mrb[0].mxu0
  %v419 = vpop.f32.mrb[0].mxu0
  %v420 = vadd.f32 %v335, %v419
  %v421 = vpop.f32.mrb[0].mxu0
  %422 = vmatprep.mubr.bf16.mxu0 0
  %423 = vmatmul.mubr.bf16.gmra.mrb[0].mxu0 %v369
  %v424 = vpop.f32.mrb[0].mxu0
  %v425 = vadd.f32 %v335, %v424
  %v426 = vpop.f32.mrb[0].mxu0
  %v427 = vpop.f32.mrb[0].mxu0
  %v428 = vadd.f32 %v335, %v427
  %v429 = vpop.f32.mrb[0].mxu0
  %430 = vmatprep.mubr.bf16.mxu0 0
  %431 = vmatmul.mubr.bf16.gmra.mrb[0].mxu0 %v372
  %v432 = vpop.f32.mrb[0].mxu0
  %v433 = vadd.f32 %v335, %v432
  %v434 = vpop.f32.mrb[0].mxu0
  %v435 = vpop.f32.mrb[0].mxu0
  %v436 = vadd.f32 %v335, %v435
  %v437 = vpop.f32.mrb[0].mxu0
  %438 = vdwg.mxu0
  %v439 = vmax.f32 %v409, 0.0
  %v440 = vmax.f32 %v412, 0.0
  %v441 = vmax.f32 %v417, 0.0
  %v442 = vmax.f32 %v420, 0.0
  %v443 = vmax.f32 %v425, 0.0
  %v444 = vmax.f32 %v428, 0.0
  %v445 = vmax.f32 %v433, 0.0
  %v446 = vmax.f32 %v436, 0.0
  %v447 = vpack.c.bf16 %v440, %v439
  %v448 = vpack.c.bf16 %v442, %v441
  %v449 = vpack.c.bf16 %v444, %v443
  %v450 = vpack.c.bf16 %v446, %v445
  %v451 = vld [vmem:[%s7] sm:$0xf]
  %v452 = vld [vmem:[%s7 + $0x4] sm:$0xf]
  %v453 = vld [vmem:[%s7 + $0x8] sm:$0xf]
  %v454 = vld [vmem:[%s7 + $0xc] sm:$0xf]
  %v455 = vld [vmem:[%s8] sm:$0x1]
  %v457 = vlaneseq
  %v458 = vshrl.u32 %v457, 7
  %v459 = vsub.s32 0, %v458
  %v460 = vrot.slane %v455, %v459
  %v466 = vunpack.c.l.b16 %v451
  %v467 = vunpack.c.l.b16 %v452
  %v468 = vunpack.c.l.b16 %v453
  %v469 = vunpack.c.l.b16 %v454
  %v470 = vpack.c.b16 %v467, %v466
  %v471 = vpack.c.b16 %v469, %v468
  %v475 = vsel %vm84, %v447, 0
  %v478 = vsel %vm84, %v448, 0
  %v481 = vsel %vm84, %v449, 0
  %v484 = vsel %vm84, %v450, 0
  %486 = vmatprep.subr.bf16.mxu0 0
  %487 = vmatpush1.bf16.msra.mxu0 %v470
  %488 = vmatprep.subr.bf16.mxu0 0
  %489 = vmatpush1.bf16.msra.mxu0 %v471
  %490 = vmatprep.subr.bf16.mxu0 0
  %491 = vmatpush1.bf16.msra.mxu0 0
  %492 = vmatprep.subr.bf16.mxu0 0
  %493 = vmatpush1.bf16.msra.mxu0 0
  %494 = vmatprep.subr.bf16.mxu0 0
  %495 = vmatpush1.bf16.msra.mxu0 0
  %496 = vmatprep.subr.bf16.mxu0 0
  %497 = vmatpush1.bf16.msra.mxu0 0
  %498 = vmatprep.subr.bf16.mxu0 0
  %499 = vmatpush1.bf16.msra.mxu0 0
  %500 = vmatprep.subr.bf16.mxu0 0
  %501 = vmatpush1.bf16.msra.mxu0 0
  %502 = vmatprep.subr.bf16.mxu0 0
  %503 = vmatpush1.bf16.msra.mxu0 0
  %504 = vmatprep.subr.bf16.mxu0 0
  %505 = vmatpush1.bf16.msra.mxu0 0
  %506 = vmatprep.subr.bf16.mxu0 0
  %507 = vmatpush1.bf16.msra.mxu0 0
  %508 = vmatprep.subr.bf16.mxu0 0
  %509 = vmatpush1.bf16.msra.mxu0 0
  %510 = vmatprep.subr.bf16.mxu0 0
  %511 = vmatpush1.bf16.msra.mxu0 0
  %512 = vmatprep.subr.bf16.mxu0 0
  %513 = vmatpush1.bf16.msra.mxu0 0
  %514 = vmatprep.subr.bf16.mxu0 0
  %515 = vmatpush1.bf16.msra.mxu0 0
  %516 = vmatprep.subr.bf16.mxu0 0
  %517 = vmatpush1.bf16.msra.mxu0 0
  %518 = vmatprep.mubr.bf16.mxu0 0
  %519 = vmatmul.mubr.bf16.gmra.mrb[0].mxu0 %v475
  %v520 = vpop.f32.mrb[0].mxu0
  %v521 = vadd.f32 %v460, %v520
  %v522 = vpop.f32.mrb[0].mxu0
  %v523 = vpop.f32.mrb[0].mxu0
  %v524 = vadd.f32 %v460, %v523
  %v525 = vpop.f32.mrb[0].mxu0
  %526 = vmatprep.mubr.bf16.mxu0 0
  %527 = vmatmul.mubr.bf16.gmra.mrb[0].mxu0 %v478
  %v528 = vpop.f32.mrb[0].mxu0
  %v529 = vadd.f32 %v460, %v528
  %v530 = vpop.f32.mrb[0].mxu0
  %v531 = vpop.f32.mrb[0].mxu0
  %v532 = vadd.f32 %v460, %v531
  %v533 = vpop.f32.mrb[0].mxu0
  %534 = vmatprep.mubr.bf16.mxu0 0
  %535 = vmatmul.mubr.bf16.gmra.mrb[0].mxu0 %v481
  %v536 = vpop.f32.mrb[0].mxu0
  %v537 = vadd.f32 %v460, %v536
  %v538 = vpop.f32.mrb[0].mxu0
  %v539 = vpop.f32.mrb[0].mxu0
  %v540 = vadd.f32 %v460, %v539
  %v541 = vpop.f32.mrb[0].mxu0
  %542 = vmatprep.mubr.bf16.mxu0 0
  %543 = vmatmul.mubr.bf16.gmra.mrb[0].mxu0 %v484
  %v544 = vpop.f32.mrb[0].mxu0
  %v545 = vadd.f32 %v460, %v544
  %v546 = vpop.f32.mrb[0].mxu0
  %v547 = vpop.f32.mrb[0].mxu0
  %v548 = vadd.f32 %v460, %v547
  %v549 = vpop.f32.mrb[0].mxu0
  %550 = vdwg.mxu0
  %vm551 = vcmask 7168
  %552 = vst.msk [vmem:[%s9] sm:$0xff] %vm551, %v521
  %553 = vst.msk [vmem:[%s9 + $0x8] sm:$0xff] %vm551, %v524
  %554 = vst.msk [vmem:[%s9 + $0x10] sm:$0xff] %vm551, %v529
  %555 = vst.msk [vmem:[%s9 + $0x18] sm:$0xff] %vm551, %v532
  %556 = vst.msk [vmem:[%s9 + $0x20] sm:$0xff] %vm551, %v537
  %557 = vst.msk [vmem:[%s9 + $0x28] sm:$0xff] %vm551, %v540
  %558 = vst.msk [vmem:[%s9 + $0x30] sm:$0xff] %vm551, %v545
  %559 = vst.msk [vmem:[%s9 + $0x38] sm:$0xff] %vm551, %v548
  // Predicated region
  $region38: #{pong_forward.1} parent=0 // pred_check
    _
  $region39: #{pong_forward.1} parent=0 // pred_check_branch
    %561 = sbr.rel (0) target = $region41
  $region40: #{pong_forward.1} parent=0 // pred_region
    _
  $region41: #{pong_forward.1} parent=0 // pred_fallthru
    _
  // Predicated region
  $region42: #{pong_forward.1} parent=0 // pred_check
    _
  $region43: #{pong_forward.1} parent=0 // pred_check_branch
    %563 = sbr.rel (0) target = $region45
  $region44: #{pong_forward.1} parent=0 // pred_region
    _
  $region45: #{pong_forward.1} parent=0 // pred_fallthru
    _

</llo_original>
